<compile_context>
chip_gen: v5e
topology: v5e:2x2
jax: 0.10.0
libtpu: 0.0.40
codegen_flags: <defaults>
</compile_context>

<pallas_src>
import functools

import jax
import jax.numpy as jnp
from jax.experimental import pallas as pl
from jax.experimental.pallas import tpu as pltpu


# --------------------------------------------------------------------------
# Kernels
# --------------------------------------------------------------------------
def _fused_kernel(inv_hw, x_ref, w_ref, b_ref, o_ref):
    """Single-pass: pool -> 1x1 conv -> sigmoid -> apply, one batch element.

    x_ref: (1, C, HW)   input slab (native dtype)
    w_ref: (C, C)       1x1-conv weight (out_ch, in_ch), f32
    b_ref: (C, 1)       bias column, f32
    o_ref: (1, C, HW)   output slab (native dtype)
    """
    x = x_ref[0]                                                      # (C, HW)
    ssum = jnp.sum(x.astype(jnp.float32), axis=-1, keepdims=True)    # (C, 1) f32
    mean = ssum * inv_hw
    y = jnp.dot(w_ref[...], mean, preferred_element_type=jnp.float32)
    y = y + b_ref[...]
    attn = jax.nn.sigmoid(y)                                          # (C, 1) f32
    # Deliberate choice: multiply in the input's native dtype (exact for f32;
    # tiny rounding for bf16 inputs, avoids materializing a full f32 slab).
    o_ref[0] = x * attn.astype(o_ref.dtype)


def _pool_sum_kernel(hw, has_tail, x_ref, sum_ref):
    """Pass 1 (fallback): accumulate per-channel spatial sums in f32.

    x_ref:   (1, C, T)   spatial tile (tail tile may read OOB lanes -> masked)
    sum_ref: (1, C, 1)   f32 running accumulator (resident across the t axis)
    """
    t = pl.program_id(1)
    tile = x_ref.shape[2]

    xf = x_ref[0].astype(jnp.float32)                                 # (C, T)
    if has_tail:
        # Out-of-bounds input lanes of an edge block are unspecified -> mask.
        col = jax.lax.broadcasted_iota(jnp.int32, xf.shape, 1)
        xf = jnp.where(col < (hw - t * tile), xf, 0.0)
    partial = jnp.sum(xf, axis=-1, keepdims=True)                     # (C, 1)

    @pl.when(t == 0)
    def _():
        sum_ref[...] = jnp.zeros_like(sum_ref)

    sum_ref[0] += partial


def _apply_kernel(x_ref, attn_ref, o_ref):
    """Pass 2 (fallback): out = x * attn, broadcast over the lane (spatial) axis.

    x_ref:    (1, C, T)
    attn_ref: (1, C, 1)  attention weights already in x.dtype (cast on host)
    o_ref:    (1, C, T)  edge blocks are partially written via masked stores
    """
    o_ref[0] = x_ref[0] * attn_ref[0]


# --------------------------------------------------------------------------
# Wrapper
# --------------------------------------------------------------------------
def _vmem_limit_bytes():
    """Scoped-VMEM budget: half the physical capacity, capped at 64 MiB."""
    try:
        cap = int(pltpu.get_tpu_info().vmem_capacity_bytes)
    except Exception:
        cap = 64 * 1024 * 1024  # conservative fallback (v7x per-core VMEM)
    return min(cap // 2, 64 * 1024 * 1024)


def channel_attention(x, weight, bias, *, target_block_bytes=2 << 20,
                      force_two_pass=False):
    """ChannelAttention forward.

    x:      (B, C, H, W)
    weight: (C, C)  1x1-conv weight (out_ch, in_ch) == torch weight[:, :, 0, 0]
    bias:   (C,)
    """
    B, C, H, W = x.shape
    HW = H * W
    dtype_bytes = jnp.dtype(x.dtype).itemsize
    inv_hw = 1.0 / float(HW)

    x_flat = x.reshape(B, C, HW)
    w_f32 = weight.astype(jnp.float32)
    b_col = bias.astype(jnp.float32).reshape(C, 1)

    vmem_limit = _vmem_limit_bytes()

    # ---- Fused single-pass path: whole per-batch (C, HW) slab in VMEM ----
    slab_bytes = C * HW * dtype_bytes
    fused_vmem_est = (4 * slab_bytes          # in + out blocks, double-buffered
                      + C * HW * 4            # possible f32 temp for the reduction
                      + C * C * 4 + C * 4     # weight + bias
                      + (1 << 20))            # slack for compiler scratch
    if (not force_two_pass) and fused_vmem_est <= vmem_limit:
        out_flat = pl.pallas_call(
            functools.partial(_fused_kernel, inv_hw),
            out_shape=jax.ShapeDtypeStruct((B, C, HW), x.dtype),
            grid_spec=pltpu.PrefetchScalarGridSpec(
                num_scalar_prefetch=0,
                grid=(B,),
                in_specs=[
                    pl.BlockSpec((1, C, HW), lambda b: (b, 0, 0)),
                    pl.BlockSpec((C, C), lambda b: (0, 0)),
                    pl.BlockSpec((C, 1), lambda b: (0, 0)),
                ],
                out_specs=pl.BlockSpec((1, C, HW), lambda b: (b, 0, 0)),
            ),
            compiler_params=pltpu.CompilerParams(
                dimension_semantics=("parallel",),
                vmem_limit_bytes=vmem_limit,
            ),
        )(x_flat, w_f32, b_col)
        return out_flat.reshape(B, C, H, W)

    # ---- Two-pass streaming fallback (bounded VMEM) ----
    LANE = 128
    # Byte-budgeted tile; clamp so pass 2's in+out double-buffers fit VMEM.
    max_block_bytes = max(LANE * C * dtype_bytes, (vmem_limit - (2 << 20)) // 4)
    block_bytes = min(int(target_block_bytes), max_block_bytes)
    T = max(LANE, (block_bytes // max(1, C * dtype_bytes)) // LANE * LANE)
    T = min(T, pl.cdiv(HW, LANE) * LANE)
    n_t = pl.cdiv(HW, T)
    has_tail = (HW % T) != 0

    # Pass 1: per-channel spatial sums (f32). Reduction axis last.
    sums = pl.pallas_call(
        functools.partial(_pool_sum_kernel, HW, has_tail),
        out_shape=jax.ShapeDtypeStruct((B, C, 1), jnp.float32),
        grid_spec=pltpu.PrefetchScalarGridSpec(
            num_scalar_prefetch=0,
            grid=(B, n_t),
            in_specs=[pl.BlockSpec((1, C, T), lambda b, t: (b, 0, t))],
            out_specs=pl.BlockSpec((1, C, 1), lambda b, t: (b, 0, 0)),
        ),
        compiler_params=pltpu.CompilerParams(
            dimension_semantics=("parallel", "arbitrary"),
            vmem_limit_bytes=vmem_limit,
        ),
    )(x_flat)

    # Tiny per-batch FC + bias + sigmoid in plain JAX: keeps the CxC weight
    # out of VMEM during streaming, and a N=1 matvec would waste the MXU.
    mean = sums[:, :, 0] * inv_hw                                     # (B, C) f32
    logits = mean @ w_f32.T + bias.astype(jnp.float32)[None, :]
    attn = jax.nn.sigmoid(logits).astype(x.dtype).reshape(B, C, 1)

    # Pass 2: out = x * attn; both grid axes independent (megacore-shardable).
    out_flat = pl.pallas_call(
        _apply_kernel,
        out_shape=jax.ShapeDtypeStruct((B, C, HW), x.dtype),
        grid_spec=pltpu.PrefetchScalarGridSpec(
            num_scalar_prefetch=0,
            grid=(B, n_t),
            in_specs=[
                pl.BlockSpec((1, C, T), lambda b, t: (b, 0, t)),
                pl.BlockSpec((1, C, 1), lambda b, t: (b, 0, 0)),
            ],
            out_specs=pl.BlockSpec((1, C, T), lambda b, t: (b, 0, t)),
        ),
        compiler_params=pltpu.CompilerParams(
            dimension_semantics=("parallel", "parallel"),
            vmem_limit_bytes=vmem_limit,
        ),
    )(x_flat, attn)

    return out_flat.reshape(B, C, H, W)


def reference_channel_attention(x, weight, bias):
    """Pure-JAX reference for correctness check."""
    pooled = jnp.mean(x, axis=(2, 3), keepdims=True)                  # (B,C,1,1)
    y = jnp.einsum("oc,bcxy->boxy", weight, pooled) + bias[None, :, None, None]
    return x * jax.nn.sigmoid(y)


if __name__ == "__main__":
    key = jax.random.PRNGKey(0)
    kx, kw, kb, kx2 = jax.random.split(key, 4)

    B, C, H, W = 2, 4, 16, 16
    x = jax.random.normal(kx, (B, C, H, W), dtype=jnp.float32)

    # Deterministic synthetic parameters for Conv2d(C, C, 1, bias=True);
    # PyTorch weight shape (C, C, 1, 1) -> squeezed to (C, C) here.
    fan_in = C
    bound = 1.0 / (fan_in ** 0.5)
    weight = jax.random.uniform(kw, (C, C), minval=-bound, maxval=bound,
                                dtype=jnp.float32)
    bias = jax.random.uniform(kb, (C,), minval=-bound, maxval=bound,
                              dtype=jnp.float32)

    # 1) Fused single-pass path (the common case).
    out = jax.block_until_ready(channel_attention(x, weight, bias))
    ref = reference_channel_attention(x, weight, bias)
    assert out.shape == (B, C, H, W)
    assert jnp.allclose(out, ref, atol=1e-5, rtol=1e-5), "fused path mismatch"

    # 2) Two-pass fallback, forced, with a ragged (non-128-multiple) spatial
    #    extent and >1 spatial tile to exercise the in-kernel tail masking and
    #    partial edge-block stores.
    H2, W2 = 15, 15                     # HW = 225 -> tiles of 128 + tail of 97
    x2 = jax.random.normal(kx2, (B, C, H2, W2), dtype=jnp.float32)
    out2 = jax.block_until_ready(
        channel_attention(x2, weight, bias, force_two_pass=True,
                          target_block_bytes=C * 128 * 4))
    ref2 = reference_channel_attention(x2, weight, bias)
    assert out2.shape == (B, C, H2, W2)
    assert jnp.allclose(out2, ref2, atol=1e-5, rtol=1e-5), "two-pass mismatch"

    print("KERNEL_OK")
</pallas_src>

<mosaic_0001>
module attributes {stable_mosaic.version = 11 : i64} {
  func.func @_fused_kernel(%arg0: i32, %arg1: memref<1x4x256xf32, #tpu.memory_space<vmem>>, %arg2: memref<4x4xf32, #tpu.memory_space<vmem>>, %arg3: memref<4x1xf32, #tpu.memory_space<vmem>>, %arg4: memref<1x4x256xf32, #tpu.memory_space<vmem>>) attributes {dimension_semantics = [#tpu.dimension_semantics<parallel>], iteration_bounds = array<i64: 2>, scalar_prefetch = 0 : i64, scratch_operands = 0 : i64, tpu.core_type = #tpu.core_type<tc>, window_params = [{transform_indices = @transform_0, window_bounds = array<i64: 1, 4, 256>}, {pipeline_mode = #tpu.pipeline_mode<synchronous>, transform_indices = @transform_1, window_bounds = array<i64: 4, 4>}, {pipeline_mode = #tpu.pipeline_mode<synchronous>, transform_indices = @transform_2, window_bounds = array<i64: 4, 1>}, {transform_indices = @transform_3, window_bounds = array<i64: 1, 4, 256>}]} {
    %c0 = arith.constant 0 : index
    %c0_0 = arith.constant 0 : index
    %c0_1 = arith.constant 0 : index
    %0 = vector.load %arg1[%c0, %c0_0, %c0_1] : memref<1x4x256xf32, #tpu.memory_space<vmem>>, vector<1x4x256xf32>
    %1 = vector.shape_cast %0 : vector<1x4x256xf32> to vector<4x256xf32>
    %cst = arith.constant dense<0.000000e+00> : vector<4xf32>
    %2 = vector.multi_reduction <add>, %1, %cst [1] : vector<4x256xf32> to vector<4xf32>
    %3 = vector.shape_cast %2 : vector<4xf32> to vector<4x1xf32>
    %cst_2 = arith.constant 3.906250e-03 : f32
    %4 = vector.broadcast %cst_2 : f32 to vector<4x1xf32>
    %5 = arith.mulf %3, %4 : vector<4x1xf32>
    %c0_3 = arith.constant 0 : index
    %c0_4 = arith.constant 0 : index
    %6 = vector.load %arg2[%c0_3, %c0_4] : memref<4x4xf32, #tpu.memory_space<vmem>>, vector<4x4xf32>
    %cst_5 = arith.constant dense<0.000000e+00> : vector<4x1xf32>
    %7 = tpu.matmul %6, %5, %cst_5 {dimension_numbers = #tpu.dot_dimension_numbers<[1], [0], [0], [1], [0, 0, 1, 1], [], []>} : vector<4x4xf32>, vector<4x1xf32>, vector<4x1xf32> -> vector<4x1xf32>
    %c0_6 = arith.constant 0 : index
    %c0_7 = arith.constant 0 : index
    %8 = vector.load %arg3[%c0_6, %c0_7] : memref<4x1xf32, #tpu.memory_space<vmem>>, vector<4x1xf32>
    %9 = arith.addf %7, %8 : vector<4x1xf32>
    %10 = arith.negf %9 : vector<4x1xf32>
    %11 = math.exp %10 : vector<4x1xf32>
    %cst_8 = arith.constant 1.000000e+00 : f32
    %12 = vector.broadcast %cst_8 : f32 to vector<4x1xf32>
    %13 = arith.addf %12, %11 : vector<4x1xf32>
    %14 = arith.divf %12, %13 : vector<4x1xf32>
    %15 = vector.broadcast %14 : vector<4x1xf32> to vector<4x256xf32>
    %16 = arith.mulf %1, %15 : vector<4x256xf32>
    %c0_9 = arith.constant 0 : index
    %c0_10 = arith.constant 0 : index
    %c0_11 = arith.constant 0 : index
    %17 = vector.load %arg4[%c0_9, %c0_10, %c0_11] : memref<1x4x256xf32, #tpu.memory_space<vmem>>, vector<1x4x256xf32>
    %18 = vector.shape_cast %17 : vector<1x4x256xf32> to vector<4x256xf32>
    %19 = vector.shape_cast %16 : vector<4x256xf32> to vector<1x4x256xf32>
    tpu.vector_store %arg4[%c0_9, %c0_10, %c0_11], %19 {strides = array<i32>} : memref<1x4x256xf32, #tpu.memory_space<vmem>>, vector<1x4x256xf32>,
    return
  }
  func.func @transform_0(%arg0: i32) -> (i32, i32, i32) {
    %c0_i32 = arith.constant 0 : i32
    %c0_i32_0 = arith.constant 0 : i32
    %c0_i32_1 = arith.constant 0 : i32
    return %arg0, %c0_i32, %c0_i32_0 : i32, i32, i32
  }
  func.func @transform_1(%arg0: i32) -> (i32, i32) {
    %c0_i32 = arith.constant 0 : i32
    %c0_i32_0 = arith.constant 0 : i32
    %c0_i32_1 = arith.constant 0 : i32
    return %c0_i32, %c0_i32_0 : i32, i32
  }
  func.func @transform_2(%arg0: i32) -> (i32, i32) {
    %c0_i32 = arith.constant 0 : i32
    %c0_i32_0 = arith.constant 0 : i32
    %c0_i32_1 = arith.constant 0 : i32
    return %c0_i32, %c0_i32_0 : i32, i32
  }
  func.func @transform_3(%arg0: i32) -> (i32, i32, i32) {
    %c0_i32 = arith.constant 0 : i32
    %c0_i32_0 = arith.constant 0 : i32
    %c0_i32_1 = arith.constant 0 : i32
    return %arg0, %c0_i32, %c0_i32_0 : i32, i32, i32
  }
}

</mosaic_0001>

<llo_original>
// kernel: tpu_custom_call.1
$region0: #{tpu_custom_call.1}
  #allocation0 [shape = 'u32[]', space=smem, size = 0x4, offset = 0x4, fixed_abs, tag = 'smem constant byte address 0x4 - core index']
  #allocation1 [shape = 'u32[72,128]{1,0:T(1,128)}', space=vmem, size = 0x9000, scoped, tag = 'internal scratch']
  %s0 = inlined_call_operand.hbm [shape: f32[2,4,256], index: 0, kind: input, shape index: {}]
  %s1 = inlined_call_operand.vmem [shape: f32[4,4], index: 1, kind: input, shape index: {}]
  %s2 = inlined_call_operand.vmem [shape: f32[4,1], index: 2, kind: input, shape index: {}]
  %s3 = inlined_call_operand.hbm [shape: f32[2,4,256], index: 3, kind: output, shape index: {}]
  %s4 = sld [smem:[#allocation0]]
  $region49: #{tpu_custom_call.1} parent=0
    _
  %s6 = ssub.s32 1, %s4
  %s7 = scalar_select 0, %s6, %s4
  $region1: #{tpu_custom_call.1} parent=0
    #allocation2 [shape = 'u8[8192]{0}', space=vmem, size = 0x2000, scoped, tag = 'input window, operand 0']
    #allocation3 [shape = 's32[2]{0}', space=sflag, size = 0x8, scoped, tag = 'scoped memory for tpu_custom_call.1']
    #allocation4 [shape = 's32[2]{0}', space=sflag, size = 0x8, scoped, tag = 'scoped memory for tpu_custom_call.1']
    #allocation5 [shape = 'u8[8192]{0}', space=vmem, size = 0x2000, scoped, tag = 'output window, operand 0']
    %8 = vsyncpa [#allocation3], 0
    %s9 = scalar_lea.sflag [#allocation3], 1
    %10 = vsyncpa %s9, 0
    %11 = vsyncpa [#allocation4], 0
    %s12 = scalar_lea.sflag [#allocation4], 1
    %13 = vsyncpa %s12, 0
    loop: start=0, step=1, limit=4
    $region2: #{tpu_custom_call.1} parent=1 // loop_pre_header
      _
    $region3: #{tpu_custom_call.1} parent=1 // loop_header
      %s15 = sphi 0, %s19
      %p16 = scmp.ge.s32.totalorder %s15, 4
      %s25 = sphi 0, %s27
      %s28 = sphi 0, %s25
      %s29 = sphi 0, %s28
      %s45 = sphi 0, %s29
      %s49 = sphi 0, %s49
      %s51 = sphi 0, %s49
      %s52 = sphi 0, %s51
      %s66 = sphi 0, %s52
      %s70 = sphi 0, %s70
      %s72 = sphi 0, %s70
      %s73 = sphi 0, %s72
      %s87 = sphi 0, %s73
      %s93 = sphi 0, %s95
      %s96 = sphi 0, %s93
      %s97 = sphi 0, %s96
      %s113 = sphi 0, %s97
    $region4: #{tpu_custom_call.1} parent=1 // loop_header_branch
      %18 = sbr.rel (%p16) target = $region8
    $region5: #{tpu_custom_call.1} parent=1 // loop_body
      %s20 = ssub.s32 %s15, 1
      %s21 = ssub.s32 %s15, 2
      %s22 = sadd.s32 %s15, 1
      %s23 = ssub.s32 %s15, %s22
      %p24 = scmp.eq.s32.totalorder %s23, 0
      %s26 = sadd.s32 %s25, 1
      %s27 = scalar_select %p24, %s25, %s26
      %p30 = pneg %p24
      %p31 = scmp.eq.s32.totalorder %s15, 1
      %p32 = por %p30, %p31
      %p33 = scmp.ne.s32.totalorder %s25, %s28
      %p34 = scmp.eq.s32.totalorder %s15, 0
      %p35 = por %p33, %p34
      %p36 = scmp.ne.s32.totalorder %s25, %s28
      %p37 = scmp.eq.s32.totalorder %s20, 1
      %p38 = por %p36, %p37
      %p39 = scmp.ne.s32.totalorder %s28, %s29
      %p40 = scmp.eq.s32.totalorder %s20, 0
      %p41 = por %p39, %p40
      %p42 = scmp.ne.s32.totalorder %s28, %s29
      %p43 = scmp.eq.s32.totalorder %s21, 1
      %p44 = por %p42, %p43
      %p46 = scmp.ne.s32.totalorder %s29, %s45
      %p47 = scmp.eq.s32.totalorder %s21, 0
      %p48 = por %p46, %p47
      %s50 = sadd.s32 %s49, 1
      %p53 = scmp.eq.s32.totalorder %s15, 1
      %p54 = scmp.ne.s32.totalorder %s49, %s51
      %p55 = scmp.eq.s32.totalorder %s15, 0
      %p56 = por %p54, %p55
      %p57 = scmp.ne.s32.totalorder %s49, %s51
      %p58 = scmp.eq.s32.totalorder %s20, 1
      %p59 = por %p57, %p58
      %p60 = scmp.ne.s32.totalorder %s51, %s52
      %p61 = scmp.eq.s32.totalorder %s20, 0
      %p62 = por %p60, %p61
      %p63 = scmp.ne.s32.totalorder %s51, %s52
      %p64 = scmp.eq.s32.totalorder %s21, 1
      %p65 = por %p63, %p64
      %p67 = scmp.ne.s32.totalorder %s52, %s66
      %p68 = scmp.eq.s32.totalorder %s21, 0
      %p69 = por %p67, %p68
      %s71 = sadd.s32 %s70, 1
      %p74 = scmp.eq.s32.totalorder %s15, 1
      %p75 = scmp.ne.s32.totalorder %s70, %s72
      %p76 = scmp.eq.s32.totalorder %s15, 0
      %p77 = por %p75, %p76
      %p78 = scmp.ne.s32.totalorder %s70, %s72
      %p79 = scmp.eq.s32.totalorder %s20, 1
      %p80 = por %p78, %p79
      %p81 = scmp.ne.s32.totalorder %s72, %s73
      %p82 = scmp.eq.s32.totalorder %s20, 0
      %p83 = por %p81, %p82
      %p84 = scmp.ne.s32.totalorder %s72, %s73
      %p85 = scmp.eq.s32.totalorder %s21, 1
      %p86 = por %p84, %p85
      %p88 = scmp.ne.s32.totalorder %s73, %s87
      %p89 = scmp.eq.s32.totalorder %s21, 0
      %p90 = por %p88, %p89
      %s91 = ssub.s32 %s15, %s22
      %p92 = scmp.eq.s32.totalorder %s91, 0
      %s94 = sadd.s32 %s93, 1
      %s95 = scalar_select %p92, %s93, %s94
      %p98 = pneg %p92
      %p99 = scmp.eq.s32.totalorder %s15, 1
      %p100 = por %p98, %p99
      %p101 = scmp.ne.s32.totalorder %s93, %s96
      %p102 = scmp.eq.s32.totalorder %s15, 0
      %p103 = por %p101, %p102
      %p104 = scmp.ne.s32.totalorder %s93, %s96
      %p105 = scmp.eq.s32.totalorder %s20, 1
      %p106 = por %p104, %p105
      %p107 = scmp.ne.s32.totalorder %s96, %s97
      %p108 = scmp.eq.s32.totalorder %s20, 0
      %p109 = por %p107, %p108
      %p110 = scmp.ne.s32.totalorder %s96, %s97
      %p111 = scmp.eq.s32.totalorder %s21, 1
      %p112 = por %p110, %p111
      %p114 = scmp.ne.s32.totalorder %s97, %s113
      %p115 = scmp.eq.s32.totalorder %s21, 0
      %p116 = por %p114, %p115
      %p117 = scmp.le.s32.totalorder 1, %s15
      %p118 = scmp.lt.s32.totalorder %s15, 3
      %p119 = pnand %p117, %p118
      %p120 = pneg %p119
      // Predicated region
      $region9: #{tpu_custom_call.1} parent=5 // pred_check
        _
      $region10: #{tpu_custom_call.1} parent=5 // pred_check_branch
        %122 = sbr.rel (%p119) target = $region12
      $region11: #{tpu_custom_call.1} parent=5 // pred_region
        %s123 = ssub.s32 %s15, 1
        // Predicated region
        $region13: #{tpu_custom_call.1} parent=11 // pred_check
          %p124 = pneg %p62
        $region14: #{tpu_custom_call.1} parent=11 // pred_check_branch
          %126 = sbr.rel (%p124) target = $region16
        $region15: #{tpu_custom_call.1} parent=11 // pred_region
          _
        $region16: #{tpu_custom_call.1} parent=11 // pred_fallthru
          _
        // Predicated region
        $region17: #{tpu_custom_call.1} parent=11 // pred_check
          %p127 = pneg %p83
        $region18: #{tpu_custom_call.1} parent=11 // pred_check_branch
          %129 = sbr.rel (%p127) target = $region20
        $region19: #{tpu_custom_call.1} parent=11 // pred_region
          _
        $region20: #{tpu_custom_call.1} parent=11 // pred_fallthru
          _
      $region12: #{tpu_custom_call.1} parent=5 // pred_fallthru
        _
      %p130 = scmp.lt.s32.totalorder %s15, 2
      // Predicated region
      $region21: #{tpu_custom_call.1} parent=5 // pred_check
        %p131 = pneg %p130
      $region22: #{tpu_custom_call.1} parent=5 // pred_check_branch
        %133 = sbr.rel (%p131) target = $region24
      $region23: #{tpu_custom_call.1} parent=5 // pred_region
        // Predicated region
        $region25: #{tpu_custom_call.1} parent=23 // pred_check
          %p134 = pneg %p35
        $region26: #{tpu_custom_call.1} parent=23 // pred_check_branch
          %136 = sbr.rel (%p134) target = $region28
        $region27: #{tpu_custom_call.1} parent=23 // pred_region
          %s137 = sand.u32 %s25, 1
          %s138 = scalar_lea.sflag [#allocation3], %s137
          %s139 = sand.u32 %s25, 1
          %s140 = smul.addr %s139, 8
          %s141 = scalar_lea.vmem [#allocation2], %s140
          %143 = vsyncadd %s138, 0
          %s144 = smul.addr %s15, 2
          %s145 = smul.addr %s144, 4
          %s146 = scalar_lea.hbm %s0, %s145
          %s148 = sshll.u32 %s146, 4
          %s149 = int_to_ptr.hbm [resolvable:$true] %s148
          %s150 = sshll.u32 %s141, 4
          %s151 = int_to_ptr.vmem [resolvable:$true] %s150
          %153 = dma.hbm_to_vmem [thread:$0]  %s149, 128, %s151, %s138
        $region28: #{tpu_custom_call.1} parent=23 // pred_fallthru
          _
      $region24: #{tpu_custom_call.1} parent=5 // pred_fallthru
        _
      %p154 = scmp.le.s32.totalorder 1, %s15
      %p155 = scmp.lt.s32.totalorder %s15, 3
      %p156 = pnand %p154, %p155
      %p157 = pneg %p156
      // Predicated region
      $region29: #{tpu_custom_call.1} parent=5 // pred_check
        _
      $region30: #{tpu_custom_call.1} parent=5 // pred_check_branch
        %159 = sbr.rel (%p156) target = $region32
      $region31: #{tpu_custom_call.1} parent=5 // pred_region
        %s160 = ssub.s32 %s15, 1
        %s161 = sand.u32 %s28, 1
        %s162 = scalar_lea.sflag [#allocation3], %s161
        %s163 = sand.u32 %s28, 1
        %s164 = smul.addr %s163, 8
        %s165 = scalar_lea.vmem [#allocation2], %s164
        // Predicated region
        $region33: #{tpu_custom_call.1} parent=31 // pred_check
          %p166 = pneg %p41
        $region34: #{tpu_custom_call.1} parent=31 // pred_check_branch
          %168 = sbr.rel (%p166) target = $region36
        $region35: #{tpu_custom_call.1} parent=31 // pred_region
          %170 = dma.done %s162, 128
        $region36: #{tpu_custom_call.1} parent=31 // pred_fallthru
          _
        %s171 = sand.u32 %s28, 1
        %s172 = scalar_lea.sflag [#allocation3], %s171
        %s173 = sand.u32 %s28, 1
        %s174 = smul.addr %s173, 8
        %s175 = scalar_lea.vmem [#allocation2], %s174
        %p176 = pneg %p41
        %p177 = pneg %p38
        %p178 = pneg %p62
        %p179 = pneg %p59
        %p180 = pneg %p83
        %p181 = pneg %p80
        %p182 = pneg %p109
        %p183 = pneg %p106
        %s184 = sand.u32 %s96, 1
        %s185 = scalar_lea.sflag [#allocation4], %s184
        %s186 = sand.u32 %s96, 1
        %s187 = smul.addr %s186, 8
        %s188 = scalar_lea.vmem [#allocation5], %s187
        %v189 = vld [vmem:[%s165] sm:$0xff]
        %191 = vst [vmem:[#allocation1] ss:$2 sm:$0xff] %v189
        %v192 = vld.sshfl [vmem:[#allocation1] sm:$0xff pattern:$0x75316420]
        %v193 = vld.sshfl [vmem:[#allocation1 + $0x8] sm:$0xff pattern:$0x75316420]
        %vm196 = vcmask 1043456
        %v197 = vsel %vm196, %v192, 0.0
        %v198 = vsel %vm196, %v193, 0.0
        %v199 = vadd.f32 %v197, %v198
        %200 = vadd.xlane.f32.xlu0 %v199
        %v201 = vpop.xlane.xlu0 %200
        %v202 = vmul.f32 %v201, 0.00390625
        %v203 = vld [vmem:[%s1] sm:$0xf]
        %v204 = vld [vmem:[%s2] sm:$0xf]
        %vm205 = vcmask 31744
        %v207 = vsel %vm205, %v203, 0
        %v210 = vsel %vm196, %v202, 0
        %212 = vmatpush.msra.mxu0 0.0
        %213 = vmatpush.msra.mxu0 0.0
        %214 = vmatpush.msra.mxu0 0.0
        %215 = vmatpush.msra.mxu0 0.0
        %216 = vmatpush.msra.mxu0 0.0
        %217 = vmatpush.msra.mxu0 0.0
        %218 = vmatpush.msra.mxu0 0.0
        %219 = vmatpush.msra.mxu0 0.0
        %220 = vmatpush.msra.mxu0 0.0
        %221 = vmatpush.msra.mxu0 0.0
        %222 = vmatpush.msra.mxu0 0.0
        %223 = vmatpush.msra.mxu0 0.0
        %224 = vmatpush.msra.mxu0 0.0
        %225 = vmatpush.msra.mxu0 0.0
        %226 = vmatpush.msra.mxu0 0.0
        %227 = vmatpush.msra.mxu0 %v210
        %228 = vmatmul.f32.gmra.mxu0 %v207
        %v229 = vpop.f32.mrf.mxu0
        %v230 = vadd.f32 %v204, %v229
        %231 = vdwg.mxu0
        %v232 = vxor.u32 %v230, 2147483648
        %v233 = vmul.f32 %v232, 1.442695
        %v234 = vpow.pop %v233
        %v235 = vadd.f32 %v234, 1.0
        %v236 = vrcp.pop %v235
        %v237 = vmul.f32 %v235, %v236
        %v238 = vsub.f32 1.0, %v237
        %v239 = vmul.f32 %v236, %v238
        %v240 = vadd.f32 %v236, %v239
        %vm241 = vweird.f32 %v235
        %vm242 = vweird.f32 %v236
        %vm243 = vmor %vm241, %vm242
        %v244 = vsel %vm243, %v236, %v240
        %v245 = vand.u32 2147483647, %v235
        %vm246 = vcmp.eq.f32.partialorder %v245, 8.507059e+37
        %v247 = vand.u32 %v235, 2147483648
        %v248 = vor.u32 1.1754944e-38, %v247
        %v249 = vsel %vm246, %v248, %v244
        %v250 = vmul.f32 1.0, %v249
        %252 = vset.pattern.permute.xlu0 0
        %253 = vperm.xlu0 %252, %v250
        %v254 = vpop.permute.xlu0 %253
        %v256 = vunpack.c.l.s4 839922192
        %v257 = vunpack.c.0.s8 %v256
        %v258 = vperm.slane %v254, %v257
        %v260 = vmul.f32 %v189, %v258
        %261 = vst [vmem:[%s188] sm:$0xff] %v260
        %s262 = sand.u32 %s96, 1
        %s263 = scalar_lea.sflag [#allocation4], %s262
        %s264 = sand.u32 %s96, 1
        %s265 = smul.addr %s264, 8
        %s266 = scalar_lea.vmem [#allocation5], %s265
        // Predicated region
        $region37: #{tpu_custom_call.1} parent=31 // pred_check
          %p267 = pneg %p106
        $region38: #{tpu_custom_call.1} parent=31 // pred_check_branch
          %269 = sbr.rel (%p267) target = $region40
        $region39: #{tpu_custom_call.1} parent=31 // pred_region
          %271 = vsyncadd %s263, 0
          %s272 = smul.addr %s20, 2
          %s273 = smul.addr %s272, 4
          %s274 = scalar_lea.hbm %s3, %s273
          %s276 = sshll.u32 %s266, 4
          %s277 = int_to_ptr.vmem [resolvable:$true] %s276
          %s278 = sshll.u32 %s274, 4
          %s279 = int_to_ptr.hbm [resolvable:$true] %s278
          %281 = dma.vmem_to_hbm [thread:$0]  %s277, 128, %s279, %s263
        $region40: #{tpu_custom_call.1} parent=31 // pred_fallthru
          _
      $region32: #{tpu_custom_call.1} parent=5 // pred_fallthru
        _
      %p282 = scmp.le.s32.totalorder 2, %s15
      // Predicated region
      $region41: #{tpu_custom_call.1} parent=5 // pred_check
        %p283 = pneg %p282
      $region42: #{tpu_custom_call.1} parent=5 // pred_check_branch
        %285 = sbr.rel (%p283) target = $region44
      $region43: #{tpu_custom_call.1} parent=5 // pred_region
        %s286 = ssub.s32 %s15, 2
        // Predicated region
        $region45: #{tpu_custom_call.1} parent=43 // pred_check
          %p287 = pneg %p112
        $region46: #{tpu_custom_call.1} parent=43 // pred_check_branch
          %289 = sbr.rel (%p287) target = $region48
        $region47: #{tpu_custom_call.1} parent=43 // pred_region
          %s290 = sand.u32 %s97, 1
          %s291 = scalar_lea.sflag [#allocation4], %s290
          %s292 = sand.u32 %s97, 1
          %s293 = smul.addr %s292, 8
          %s294 = scalar_lea.vmem [#allocation5], %s293
          %296 = dma.done %s291, 128
        $region48: #{tpu_custom_call.1} parent=43 // pred_fallthru
          _
      $region44: #{tpu_custom_call.1} parent=5 // pred_fallthru
        _
    $region6: #{tpu_custom_call.1} parent=1 // loop_footer
      %s19 = sadd.s32 1, %s15
    $region7: #{tpu_custom_call.1} parent=1 // loop_footer_branch
      %14 = sbr.rel target = $region3
    $region8: #{tpu_custom_call.1} parent=1 // loop_exit
      _
    %297 = vsyncpa [#allocation3], 1
    %s298 = scalar_lea.sflag [#allocation3], 1
    %299 = vsyncpa %s298, 1
    %300 = vsyncpa [#allocation4], 1
    %s301 = scalar_lea.sflag [#allocation4], 1
    %302 = vsyncpa %s301, 1

</llo_original>
